<compile_context>
chip_gen: v7x
topology: tpu7x:2x2x1
jax: 0.10.0
libtpu: 0.0.40
codegen_flags: <defaults>
</compile_context>

<pallas_src>
import math
import functools

import jax
import jax.numpy as jnp
from jax.experimental import pallas as pl
from jax.experimental.pallas import tpu as pltpu


def _round_up(a: int, b: int) -> int:
    return (a + b - 1) // b * b


# -----------------------------------------------------------------------------
# Kernels
# -----------------------------------------------------------------------------
def _stereo_packed_kernel(xp_ref, wbd_ref, ones_ref, exp_ref, wc_ref, o_ref):
    """Lane-packed tile: P original rows share the 128 output lanes.

    xp_ref  : (TP, P*D)   packed input rows (inp_scaler folded into weights)
    wbd_ref : (P*D, 128)  block-diagonal s*W[:, :D].T        (VMEM resident)
    ones_ref: (P*D, P)    block "ones" column scaled by s^2  (VMEM resident)
    exp_ref : (P, 128)    per-row -> per-lane expansion      (VMEM resident)
    wc_ref  : (2, 128)    row0 = tile(W[:,D], P), row1 = tile(W[:,D]+bias, P)
    """
    xp = xp_ref[...].astype(jnp.float32)                                     # (TP, PD)
    # Squared norms of the P packed rows via the MXU (no XLU cross-lane reduce).
    sq = jnp.dot(xp * xp, ones_ref[...], preferred_element_type=jnp.float32)  # (TP, P)
    two_inv = 2.0 * pl.reciprocal(sq + 1.0, approx=False)                     # (TP, P)
    # Broadcast the per-row scale to its 16 output lanes via the MXU.
    scale = jnp.dot(two_inv, exp_ref[...], preferred_element_type=jnp.float32)  # (TP, 128)
    z = jnp.dot(xp, wbd_ref[...], preferred_element_type=jnp.float32)           # (TP, 128)
    o_ref[...] = (scale * (z - wc_ref[0:1, :]) + wc_ref[1:2, :]).astype(o_ref.dtype)


def _stereo_rows_kernel(x_ref, wT_ref, ones_ref, wc_ref, o_ref):
    """Generic row-tiled path (any O), one original row per sublane row."""
    x = x_ref[...].astype(jnp.float32)                                        # (TN, D)
    sq = jnp.dot(x * x, ones_ref[...], preferred_element_type=jnp.float32)    # (TN, 1)
    two_inv = 2.0 * pl.reciprocal(sq + 1.0, approx=False)                     # (TN, 1)
    z = jnp.dot(x, wT_ref[...], preferred_element_type=jnp.float32)           # (TN, O)
    o_ref[...] = (two_inv * (z - wc_ref[0:1, :]) + wc_ref[1:2, :]).astype(o_ref.dtype)


# -----------------------------------------------------------------------------
# Wrapper
# -----------------------------------------------------------------------------
_VMEM_TILE_BUDGET = 24 << 20          # bytes for the double-buffered I/O tiles
_VMEM_LIMIT = 48 * 1024 * 1024        # explicit scoped-VMEM limit (<= all physical caps)


def _prep_params(weight, bias, inp_scaler, D):
    """Fold inp_scaler into the weight; precompute c = W[:,D] + bias."""
    s = jnp.asarray(inp_scaler, jnp.float32).reshape(())
    wT = weight[:, :D].astype(jnp.float32).T * s                 # (D, O)
    wlast = weight[:, D].astype(jnp.float32)                     # (O,)
    b = bias.astype(jnp.float32) if bias is not None else jnp.zeros_like(wlast)
    return s, wT, wlast, wlast + b


def _forward_packed(x, weight, bias, inp_scaler, P, block_rows):
    N, D = x.shape
    O = weight.shape[0]
    PD, PO = P * D, P * O                                        # PO == 128

    Np = _round_up(N, P)
    if Np != N:
        # TODO(synk): ragged batches pay one extra HBM copy for the zero-row pad;
        # batch % P == 0 keeps the reshape below zero-copy.
        x = jnp.pad(x, ((0, Np - N), (0, 0)))
    Rp = Np // P
    xp = x.reshape(Rp, PD)                                       # zero-copy for row-major x

    s, wT, wlast, c = _prep_params(weight, bias, inp_scaler, D)
    eye = jnp.eye(P, dtype=jnp.float32)
    wbd = jnp.kron(eye, wT)                                              # (PD, PO)
    ones_blk = jnp.kron(eye, jnp.full((D, 1), s * s, jnp.float32))        # (PD, P)
    expand = jnp.kron(eye, jnp.ones((1, O), jnp.float32))                 # (P, PO)
    wc = jnp.stack([jnp.tile(wlast, P), jnp.tile(c, P)], axis=0)          # (2, PO)

    # ---- tile sizing: double-buffered (TP, PD) in + (TP, PO) out, lane-padded ----
    in_b = x.dtype.itemsize
    row_bytes = 2 * in_b * (_round_up(PD, 128) + PO)
    tp_cap = max(8, (_VMEM_TILE_BUDGET // row_bytes) // 8 * 8)
    desired = max(block_rows // P, 8)
    if Rp <= 8:
        TP = Rp
    else:
        # >=2 grid blocks so both v7x TensorCores get work.
        TP = max(8, min(desired, tp_cap, _round_up(pl.cdiv(Rp, 2), 8)))
    grid = (pl.cdiv(Rp, TP),)

    cost = pl.CostEstimate(
        flops=int(2 * Rp * PD * (PO + P) + 2 * Rp * P * PO + 3 * Rp * PO + Rp * PD),
        transcendentals=0,
        bytes_accessed=int(in_b * Np * D + in_b * Np * O
                           + 4 * (PD * PO + PD * P + P * PO + 2 * PO)),
    )

    out_p = pl.pallas_call(
        _stereo_packed_kernel,
        out_shape=jax.ShapeDtypeStruct((Rp, PO), x.dtype),
        grid=grid,
        in_specs=[
            pl.BlockSpec((TP, PD), lambda i: (i, 0)),   # packed rows (pipelined)
            pl.BlockSpec((PD, PO), lambda i: (0, 0)),   # block-diagonal weight (resident)
            pl.BlockSpec((PD, P), lambda i: (0, 0)),    # s^2 block-ones (resident)
            pl.BlockSpec((P, PO), lambda i: (0, 0)),    # scale expansion (resident)
            pl.BlockSpec((2, PO), lambda i: (0, 0)),    # [wlast; wlast+bias] (resident)
        ],
        out_specs=pl.BlockSpec((TP, PO), lambda i: (i, 0)),
        compiler_params=pltpu.CompilerParams(
            dimension_semantics=("parallel",),
            vmem_limit_bytes=_VMEM_LIMIT),
        cost_estimate=cost,
    )(xp, wbd, ones_blk, expand, wc)

    return out_p.reshape(Np, O)[:N]                              # zero-copy view back


def _forward_rows(x, weight, bias, inp_scaler, block_rows):
    N, D = x.shape
    O = weight.shape[0]

    s, wT, wlast, c = _prep_params(weight, bias, inp_scaler, D)
    ones_col = jnp.full((D, 1), s * s, jnp.float32)              # MXU reduction column
    wc = jnp.stack([wlast, c], axis=0)                           # (2, O)

    # Narrow tiles are lane-padded to 128 in VMEM -> budget with padded widths.
    in_b = x.dtype.itemsize
    row_bytes = 2 * in_b * (_round_up(D, 128) + _round_up(O, 128))
    tn_cap = max(8, (_VMEM_TILE_BUDGET // row_bytes) // 8 * 8)
    if N <= 8:
        TN = N
    else:
        TN = max(8, min(block_rows, tn_cap, _round_up(pl.cdiv(N, 2), 8)))
    grid = (pl.cdiv(N, TN),)

    cost = pl.CostEstimate(
        flops=int(2 * N * D * (O + 1) + 3 * N * O + N * D),
        transcendentals=0,
        bytes_accessed=int(in_b * N * D + in_b * N * O + 4 * (D * O + D + 2 * O)),
    )

    return pl.pallas_call(
        _stereo_rows_kernel,
        out_shape=jax.ShapeDtypeStruct((N, O), x.dtype),
        grid=grid,
        in_specs=[
            pl.BlockSpec((TN, D), lambda i: (i, 0)),    # x row tile (pipelined)
            pl.BlockSpec((D, O), lambda i: (0, 0)),     # s * W[:, :D].T (resident)
            pl.BlockSpec((D, 1), lambda i: (0, 0)),     # s^2 ones column (resident)
            pl.BlockSpec((2, O), lambda i: (0, 0)),     # [wlast; wlast+bias] (resident)
        ],
        out_specs=pl.BlockSpec((TN, O), lambda i: (i, 0)),
        compiler_params=pltpu.CompilerParams(
            dimension_semantics=("parallel",),
            vmem_limit_bytes=_VMEM_LIMIT),
        cost_estimate=cost,
    )(x, wT, ones_col, wc)


@functools.partial(jax.jit, static_argnames=("block_rows", "normalize"))
def stereographic_transform(x, weight, bias, inp_scaler, *, block_rows=32768,
                            normalize=False):
    """x: (N, D), weight: (O, D+1), bias: (O,) or None, inp_scaler: scalar -> (N, O)."""
    N, D = x.shape
    O = weight.shape[0]
    assert weight.shape[1] == D + 1

    if normalize:  # functional equivalent of the module's in-place weight renorm
        weight = weight / jnp.linalg.norm(weight, axis=1, keepdims=True)

    P = 128 // O if (O <= 128 and 128 % O == 0) else 1
    if P >= 2 and N >= 8 * P:
        return _forward_packed(x, weight, bias, inp_scaler, P, block_rows)
    return _forward_rows(x, weight, bias, inp_scaler, block_rows)


# -----------------------------------------------------------------------------
# Pure-JAX reference mirroring the PyTorch code
# -----------------------------------------------------------------------------
def reference_forward(x, weight, bias, inp_scaler):
    x = x * inp_scaler
    sqnorm = jnp.sum(x ** 2, axis=1, keepdims=True)
    xs = x * 2.0 / (sqnorm + 1.0)
    new_dim = (sqnorm - 1.0) / (sqnorm + 1.0)
    xcat = jnp.concatenate([xs, new_dim], axis=1)
    return xcat @ weight.T + bias


if __name__ == "__main__":
    D, O = 32, 16
    key = jax.random.PRNGKey(0)
    kx, kw, kb, kx2, kw3, kb3, kx3 = jax.random.split(key, 7)

    fan_in = D + 1
    bound = 1.0 / math.sqrt(fan_in)
    weight = jax.random.uniform(kw, (O, fan_in), jnp.float32, -bound, bound)
    weight = weight / jnp.linalg.norm(weight, axis=1, keepdims=True)
    bias = jax.random.uniform(kb, (O,), jnp.float32, -bound, bound)
    inp_scaler = jnp.asarray([1.0 / math.sqrt(D)], jnp.float32)

    # 1) Small batch (generic row-tiled path, single block).
    x = jax.random.normal(kx, (8, D), jnp.float32)
    out = jax.block_until_ready(stereographic_transform(x, weight, bias, inp_scaler))
    ref = reference_forward(x, weight, bias, inp_scaler)
    assert out.shape == ref.shape
    assert jnp.allclose(out, ref, atol=1e-5, rtol=1e-5), (
        f"small-batch max abs err {jnp.max(jnp.abs(out - ref))}")

    # 2) Larger ragged batch (lane-packed path, multi-tile pipelined grid + pad).
    x2 = jax.random.normal(kx2, (4100, D), jnp.float32)
    out2 = jax.block_until_ready(
        stereographic_transform(x2, weight, bias, inp_scaler, block_rows=1024))
    ref2 = reference_forward(x2, weight, bias, inp_scaler)
    assert out2.shape == ref2.shape
    assert jnp.allclose(out2, ref2, atol=1e-5, rtol=1e-5), (
        f"packed-path max abs err {jnp.max(jnp.abs(out2 - ref2))}")

    # 3) Output dim that does not divide 128 (generic path, 2 grid blocks).
    O3 = 10
    weight3 = jax.random.uniform(kw3, (O3, fan_in), jnp.float32, -bound, bound)
    weight3 = weight3 / jnp.linalg.norm(weight3, axis=1, keepdims=True)
    bias3 = jax.random.uniform(kb3, (O3,), jnp.float32, -bound, bound)
    x3 = jax.random.normal(kx3, (16, D), jnp.float32)
    out3 = jax.block_until_ready(stereographic_transform(x3, weight3, bias3, inp_scaler))
    ref3 = reference_forward(x3, weight3, bias3, inp_scaler)
    assert out3.shape == ref3.shape
    assert jnp.allclose(out3, ref3, atol=1e-5, rtol=1e-5), (
        f"generic-O max abs err {jnp.max(jnp.abs(out3 - ref3))}")

    print("KERNEL_OK")
</pallas_src>

<mosaic_0001>
module attributes {stable_mosaic.version = 11 : i64} {
  func.func @_stereo_rows_kernel(%arg0: i32, %arg1: memref<8x32xf32, #tpu.memory_space<vmem>>, %arg2: memref<32x16xf32, #tpu.memory_space<vmem>>, %arg3: memref<32x1xf32, #tpu.memory_space<vmem>>, %arg4: memref<2x16xf32, #tpu.memory_space<vmem>>, %arg5: memref<8x16xf32, #tpu.memory_space<vmem>>) attributes {dimension_semantics = [#tpu.dimension_semantics<parallel>], iteration_bounds = array<i64: 1>, scalar_prefetch = 0 : i64, scratch_operands = 0 : i64, tpu.core_type = #tpu.core_type<tc>, window_params = [{transform_indices = @transform_0, window_bounds = array<i64: 8, 32>}, {pipeline_mode = #tpu.pipeline_mode<synchronous>, transform_indices = @transform_1, window_bounds = array<i64: 32, 16>}, {pipeline_mode = #tpu.pipeline_mode<synchronous>, transform_indices = @transform_2, window_bounds = array<i64: 32, 1>}, {pipeline_mode = #tpu.pipeline_mode<synchronous>, transform_indices = @transform_3, window_bounds = array<i64: 2, 16>}, {transform_indices = @transform_4, window_bounds = array<i64: 8, 16>}]} {
    %c0 = arith.constant 0 : index
    %c0_0 = arith.constant 0 : index
    %0 = vector.load %arg1[%c0, %c0_0] : memref<8x32xf32, #tpu.memory_space<vmem>>, vector<8x32xf32>
    %1 = arith.mulf %0, %0 : vector<8x32xf32>
    %c0_1 = arith.constant 0 : index
    %c0_2 = arith.constant 0 : index
    %2 = vector.load %arg3[%c0_1, %c0_2] : memref<32x1xf32, #tpu.memory_space<vmem>>, vector<32x1xf32>
    %cst = arith.constant dense<0.000000e+00> : vector<8x1xf32>
    %3 = tpu.matmul %1, %2, %cst {dimension_numbers = #tpu.dot_dimension_numbers<[1], [0], [0], [1], [0, 0, 1, 1], [], []>} : vector<8x32xf32>, vector<32x1xf32>, vector<8x1xf32> -> vector<8x1xf32>
    %cst_3 = arith.constant 1.000000e+00 : f32
    %4 = vector.broadcast %cst_3 : f32 to vector<8x1xf32>
    %5 = arith.addf %3, %4 : vector<8x1xf32>
    %6 = tpu.reciprocal %5 : vector<8x1xf32> -> vector<8x1xf32>
    %cst_4 = arith.constant 2.000000e+00 : f32
    %7 = vector.broadcast %cst_4 : f32 to vector<8x1xf32>
    %8 = arith.mulf %7, %6 : vector<8x1xf32>
    %c0_5 = arith.constant 0 : index
    %c0_6 = arith.constant 0 : index
    %9 = vector.load %arg2[%c0_5, %c0_6] : memref<32x16xf32, #tpu.memory_space<vmem>>, vector<32x16xf32>
    %cst_7 = arith.constant dense<0.000000e+00> : vector<8x16xf32>
    %10 = tpu.matmul %0, %9, %cst_7 {dimension_numbers = #tpu.dot_dimension_numbers<[1], [0], [0], [1], [0, 0, 1, 1], [], []>} : vector<8x32xf32>, vector<32x16xf32>, vector<8x16xf32> -> vector<8x16xf32>
    %c0_8 = arith.constant 0 : index
    %c0_9 = arith.constant 0 : index
    %11 = vector.load %arg4[%c0_8, %c0_9] : memref<2x16xf32, #tpu.memory_space<vmem>>, vector<1x16xf32>
    %12 = vector.broadcast %11 : vector<1x16xf32> to vector<8x16xf32>
    %13 = arith.subf %10, %12 : vector<8x16xf32>
    %14 = vector.broadcast %8 : vector<8x1xf32> to vector<8x16xf32>
    %15 = arith.mulf %14, %13 : vector<8x16xf32>
    %c1 = arith.constant 1 : index
    %c0_10 = arith.constant 0 : index
    %16 = vector.load %arg4[%c1, %c0_10] : memref<2x16xf32, #tpu.memory_space<vmem>>, vector<1x16xf32>
    %17 = vector.broadcast %16 : vector<1x16xf32> to vector<8x16xf32>
    %18 = arith.addf %15, %17 : vector<8x16xf32>
    %c0_11 = arith.constant 0 : index
    %c0_12 = arith.constant 0 : index
    %19 = vector.load %arg5[%c0_11, %c0_12] : memref<8x16xf32, #tpu.memory_space<vmem>>, vector<8x16xf32>
    tpu.vector_store %arg5[%c0_11, %c0_12], %18 {strides = array<i32>} : memref<8x16xf32, #tpu.memory_space<vmem>>, vector<8x16xf32>,
    return
  }
  func.func @transform_0(%arg0: i32) -> (i32, i32) {
    %c0_i32 = arith.constant 0 : i32
    %c0_i32_0 = arith.constant 0 : i32
    return %arg0, %c0_i32 : i32, i32
  }
  func.func @transform_1(%arg0: i32) -> (i32, i32) {
    %c0_i32 = arith.constant 0 : i32
    %c0_i32_0 = arith.constant 0 : i32
    %c0_i32_1 = arith.constant 0 : i32
    return %c0_i32, %c0_i32_0 : i32, i32
  }
  func.func @transform_2(%arg0: i32) -> (i32, i32) {
    %c0_i32 = arith.constant 0 : i32
    %c0_i32_0 = arith.constant 0 : i32
    %c0_i32_1 = arith.constant 0 : i32
    return %c0_i32, %c0_i32_0 : i32, i32
  }
  func.func @transform_3(%arg0: i32) -> (i32, i32) {
    %c0_i32 = arith.constant 0 : i32
    %c0_i32_0 = arith.constant 0 : i32
    %c0_i32_1 = arith.constant 0 : i32
    return %c0_i32, %c0_i32_0 : i32, i32
  }
  func.func @transform_4(%arg0: i32) -> (i32, i32) {
    %c0_i32 = arith.constant 0 : i32
    %c0_i32_0 = arith.constant 0 : i32
    return %arg0, %c0_i32 : i32, i32
  }
}

</mosaic_0001>

<llo_original>
// kernel: stereographic_transform.1
$region0: #{stereographic_transform.1}
  #allocation0 [shape = 'u32[]', space=smem, size = 0x4, offset = 0x4, fixed_abs, tag = 'smem constant byte address 0x4 - core index']
  #allocation1 [shape = 'u32[144,128]{1,0:T(1,128)}', space=vmem, size = 0x12000, scoped, tag = 'internal scratch']
  %s0 = inlined_call_operand.vmem [shape: f32[8,32], index: 0, kind: input, shape index: {}]
  %s1 = inlined_call_operand.vmem [shape: f32[32,16], index: 1, kind: input, shape index: {}]
  %s2 = inlined_call_operand.vmem [shape: f32[32,1], index: 2, kind: input, shape index: {}]
  %s3 = inlined_call_operand.vmem [shape: f32[2,16], index: 3, kind: input, shape index: {}]
  %s4 = inlined_call_operand.hbm [shape: f32[8,16], index: 4, kind: output, shape index: {}]
  %s5 = sld [smem:[#allocation0]]
  $region26: #{stereographic_transform.1} parent=0
    _
  %s7 = ssub.s32 1, %s5
  %s8 = scalar_select 0, %s7, %s5
  $region1: #{stereographic_transform.1} parent=0
    #allocation2 [shape = 'u8[4096]{0}', space=vmem, size = 0x1000, scoped, tag = 'output window, operand 0, single buffered']
    #allocation3 [shape = 's32[1]{0}', space=sflag, size = 0x4, scoped, tag = 'scoped memory for stereographic_transform.1']
    %9 = vsyncpa [#allocation3], 0
    // Predicated region
    $region2: #{stereographic_transform.1} parent=1 // pred_check
      _
    $region3: #{stereographic_transform.1} parent=1 // pred_check_branch
      %11 = sbr.rel (0) target = $region5
    $region4: #{stereographic_transform.1} parent=1 // pred_region
      _
    $region5: #{stereographic_transform.1} parent=1 // pred_fallthru
      _
    // Predicated region
    $region6: #{stereographic_transform.1} parent=1 // pred_check
      _
    $region7: #{stereographic_transform.1} parent=1 // pred_check_branch
      %13 = sbr.rel (0) target = $region9
    $region8: #{stereographic_transform.1} parent=1 // pred_region
      _
    $region9: #{stereographic_transform.1} parent=1 // pred_fallthru
      _
    // Predicated region
    $region10: #{stereographic_transform.1} parent=1 // pred_check
      _
    $region11: #{stereographic_transform.1} parent=1 // pred_check_branch
      %15 = sbr.rel (0) target = $region13
    $region12: #{stereographic_transform.1} parent=1 // pred_region
      _
    $region13: #{stereographic_transform.1} parent=1 // pred_fallthru
      _
    // Predicated region
    $region14: #{stereographic_transform.1} parent=1 // pred_check
      _
    $region15: #{stereographic_transform.1} parent=1 // pred_check_branch
      %17 = sbr.rel (0) target = $region17
    $region16: #{stereographic_transform.1} parent=1 // pred_region
      _
    $region17: #{stereographic_transform.1} parent=1 // pred_fallthru
      _
    %v18 = vld [vmem:[%s0] sm:$0xff]
    %v19 = vmul.f32 %v18, %v18
    %v20 = vld [vmem:[%s2] sm:$0xff]
    %v21 = vld [vmem:[%s2 + $0x8] sm:$0xff]
    %v22 = vld [vmem:[%s2 + $0x10] sm:$0xff]
    %v23 = vld [vmem:[%s2 + $0x18] sm:$0xff]
    %vm24 = vcmask 261120
    %v26 = vsel %vm24, %v19, 0
    %28 = vmatprep.subr.mxu0 0.0
    %29 = vmatpush1.msra.mxu0 %v20
    %30 = vmatprep.subr.mxu0 0.0
    %31 = vmatpush1.msra.mxu0 %v21
    %32 = vmatprep.subr.mxu0 0.0
    %33 = vmatpush1.msra.mxu0 %v22
    %34 = vmatprep.subr.mxu0 0.0
    %35 = vmatpush1.msra.mxu0 %v23
    %36 = vmatprep.subr.mxu0 0.0
    %37 = vmatpush1.msra.mxu0 0.0
    %38 = vmatprep.subr.mxu0 0.0
    %39 = vmatpush1.msra.mxu0 0.0
    %40 = vmatprep.subr.mxu0 0.0
    %41 = vmatpush1.msra.mxu0 0.0
    %42 = vmatprep.subr.mxu0 0.0
    %43 = vmatpush1.msra.mxu0 0.0
    %44 = vmatprep.subr.mxu0 0.0
    %45 = vmatpush1.msra.mxu0 0.0
    %46 = vmatprep.subr.mxu0 0.0
    %47 = vmatpush1.msra.mxu0 0.0
    %48 = vmatprep.subr.mxu0 0.0
    %49 = vmatpush1.msra.mxu0 0.0
    %50 = vmatprep.subr.mxu0 0.0
    %51 = vmatpush1.msra.mxu0 0.0
    %52 = vmatprep.subr.mxu0 0.0
    %53 = vmatpush1.msra.mxu0 0.0
    %54 = vmatprep.subr.mxu0 0.0
    %55 = vmatpush1.msra.mxu0 0.0
    %56 = vmatprep.subr.mxu0 0.0
    %57 = vmatpush1.msra.mxu0 0.0
    %58 = vmatprep.subr.mxu0 0.0
    %59 = vmatpush1.msra.mxu0 0.0
    %60 = vmatprep.subr.mxu0 0.0
    %61 = vmatpush1.msra.mxu0 0.0
    %62 = vmatprep.subr.mxu0 0.0
    %63 = vmatpush1.msra.mxu0 0.0
    %64 = vmatprep.subr.mxu0 0.0
    %65 = vmatpush1.msra.mxu0 0.0
    %66 = vmatprep.subr.mxu0 0.0
    %67 = vmatpush1.msra.mxu0 0.0
    %68 = vmatprep.subr.mxu0 0.0
    %69 = vmatpush1.msra.mxu0 0.0
    %70 = vmatprep.subr.mxu0 0.0
    %71 = vmatpush1.msra.mxu0 0.0
    %72 = vmatprep.subr.mxu0 0.0
    %73 = vmatpush1.msra.mxu0 0.0
    %74 = vmatprep.subr.mxu0 0.0
    %75 = vmatpush1.msra.mxu0 0.0
    %76 = vmatprep.subr.mxu0 0.0
    %77 = vmatpush1.msra.mxu0 0.0
    %78 = vmatprep.subr.mxu0 0.0
    %79 = vmatpush1.msra.mxu0 0.0
    %80 = vmatprep.subr.mxu0 0.0
    %81 = vmatpush1.msra.mxu0 0.0
    %82 = vmatprep.subr.mxu0 0.0
    %83 = vmatpush1.msra.mxu0 0.0
    %84 = vmatprep.subr.mxu0 0.0
    %85 = vmatpush1.msra.mxu0 0.0
    %86 = vmatprep.subr.mxu0 0.0
    %87 = vmatpush1.msra.mxu0 0.0
    %88 = vmatprep.subr.mxu0 0.0
    %89 = vmatpush1.msra.mxu0 0.0
    %90 = vmatprep.subr.mxu0 0.0
    %91 = vmatpush1.msra.mxu0 0.0
    %92 = vmatprep.mubr.f32.mxu0 0.0
    %93 = vmatmul.mubr.f32.gmra.mrb[0].mxu0 %v26
    %v94 = vpop.f32.mrb[0].mxu0
    %v95 = vadd.f32 1.0, %v94
    %v96 = vpop.f32.mrb[0].mxu0
    %97 = vdwg.mxu0
    %v98 = vrcp.pop %v95
    %v99 = vmul.f32 %v98, 2.0
    %v100 = vld [vmem:[%s1] sm:$0xff]
    %v101 = vld [vmem:[%s1 + $0x8] sm:$0xff]
    %v102 = vld [vmem:[%s1 + $0x10] sm:$0xff]
    %v103 = vld [vmem:[%s1 + $0x18] sm:$0xff]
    %v105 = vsel %vm24, %v18, 0
    %107 = vmatprep.subr.mxu0 0.0
    %108 = vmatpush1.msra.mxu0 %v100
    %109 = vmatprep.subr.mxu0 0.0
    %110 = vmatpush1.msra.mxu0 %v101
    %111 = vmatprep.subr.mxu0 0.0
    %112 = vmatpush1.msra.mxu0 %v102
    %113 = vmatprep.subr.mxu0 0.0
    %114 = vmatpush1.msra.mxu0 %v103
    %115 = vmatprep.subr.mxu0 0.0
    %116 = vmatpush1.msra.mxu0 0.0
    %117 = vmatprep.subr.mxu0 0.0
    %118 = vmatpush1.msra.mxu0 0.0
    %119 = vmatprep.subr.mxu0 0.0
    %120 = vmatpush1.msra.mxu0 0.0
    %121 = vmatprep.subr.mxu0 0.0
    %122 = vmatpush1.msra.mxu0 0.0
    %123 = vmatprep.subr.mxu0 0.0
    %124 = vmatpush1.msra.mxu0 0.0
    %125 = vmatprep.subr.mxu0 0.0
    %126 = vmatpush1.msra.mxu0 0.0
    %127 = vmatprep.subr.mxu0 0.0
    %128 = vmatpush1.msra.mxu0 0.0
    %129 = vmatprep.subr.mxu0 0.0
    %130 = vmatpush1.msra.mxu0 0.0
    %131 = vmatprep.subr.mxu0 0.0
    %132 = vmatpush1.msra.mxu0 0.0
    %133 = vmatprep.subr.mxu0 0.0
    %134 = vmatpush1.msra.mxu0 0.0
    %135 = vmatprep.subr.mxu0 0.0
    %136 = vmatpush1.msra.mxu0 0.0
    %137 = vmatprep.subr.mxu0 0.0
    %138 = vmatpush1.msra.mxu0 0.0
    %139 = vmatprep.subr.mxu0 0.0
    %140 = vmatpush1.msra.mxu0 0.0
    %141 = vmatprep.subr.mxu0 0.0
    %142 = vmatpush1.msra.mxu0 0.0
    %143 = vmatprep.subr.mxu0 0.0
    %144 = vmatpush1.msra.mxu0 0.0
    %145 = vmatprep.subr.mxu0 0.0
    %146 = vmatpush1.msra.mxu0 0.0
    %147 = vmatprep.subr.mxu0 0.0
    %148 = vmatpush1.msra.mxu0 0.0
    %149 = vmatprep.subr.mxu0 0.0
    %150 = vmatpush1.msra.mxu0 0.0
    %151 = vmatprep.subr.mxu0 0.0
    %152 = vmatpush1.msra.mxu0 0.0
    %153 = vmatprep.subr.mxu0 0.0
    %154 = vmatpush1.msra.mxu0 0.0
    %155 = vmatprep.subr.mxu0 0.0
    %156 = vmatpush1.msra.mxu0 0.0
    %157 = vmatprep.subr.mxu0 0.0
    %158 = vmatpush1.msra.mxu0 0.0
    %159 = vmatprep.subr.mxu0 0.0
    %160 = vmatpush1.msra.mxu0 0.0
    %161 = vmatprep.subr.mxu0 0.0
    %162 = vmatpush1.msra.mxu0 0.0
    %163 = vmatprep.subr.mxu0 0.0
    %164 = vmatpush1.msra.mxu0 0.0
    %165 = vmatprep.subr.mxu0 0.0
    %166 = vmatpush1.msra.mxu0 0.0
    %167 = vmatprep.subr.mxu0 0.0
    %168 = vmatpush1.msra.mxu0 0.0
    %169 = vmatprep.subr.mxu0 0.0
    %170 = vmatpush1.msra.mxu0 0.0
    %171 = vmatprep.mubr.f32.mxu0 0.0
    %172 = vmatmul.mubr.f32.gmra.mrb[0].mxu0 %v105
    %v173 = vpop.f32.mrb[0].mxu0
    %v174 = vadd.f32 0.0, %v173
    %v175 = vpop.f32.mrb[0].mxu0
    %176 = vdwg.mxu0
    %v177 = vld [vmem:[%s3] sm:$0x1]
    %v178 = vlaneseq
    %v179 = vshrl.u32 %v178, 7
    %v180 = vsub.s32 0, %v179
    %v181 = vrot.slane %v177, %v180
    %v182 = vsub.f32 %v174, %v181
    %184 = vset.pattern.permute.xlu0 0
    %185 = vperm.xlu0 %184, %v99
    %v186 = vpop.permute.xlu0 %185
    %v188 = vmul.f32 %v186, %v182
    %v189 = vld [vmem:[%s3 + $0x1] sm:$0x1]
    %v190 = vlaneseq
    %v191 = vshrl.u32 %v190, 7
    %v192 = vsub.s32 0, %v191
    %v193 = vrot.slane %v189, %v192
    %v194 = vadd.f32 %v188, %v193
    %vm195 = vcmask 130048
    %196 = vst.msk [vmem:[#allocation2] sm:$0xff] %vm195, %v194
    // Predicated region
    $region18: #{stereographic_transform.1} parent=1 // pred_check
      _
    $region19: #{stereographic_transform.1} parent=1 // pred_check_branch
      %198 = sbr.rel (0) target = $region21
    $region20: #{stereographic_transform.1} parent=1 // pred_region
      %s200 = ssub.s32 128, 128
      %201 = vsyncadd [#allocation3], %s200
      %s203 = sshll.u32 [#allocation2], 4
      %s204 = int_to_ptr.vmem [resolvable:$true] %s203
      %206 = dma.vmem_to_hbm [thread:$0]  %s204, 128, %s4, [#allocation3]
    $region21: #{stereographic_transform.1} parent=1 // pred_fallthru
      _
    // Predicated region
    $region22: #{stereographic_transform.1} parent=1 // pred_check
      _
    $region23: #{stereographic_transform.1} parent=1 // pred_check_branch
      %208 = sbr.rel (0) target = $region25
    $region24: #{stereographic_transform.1} parent=1 // pred_region
      %209 = dma.done [#allocation3], 128
    $region25: #{stereographic_transform.1} parent=1 // pred_fallthru
      _
    %210 = vsyncpa [#allocation3], 1

</llo_original>
